<compile_context>
chip_gen: v7x
topology: tpu7x:2x2x1
jax: 0.10.0
libtpu: 0.0.40
codegen_flags: <defaults>
</compile_context>

<pallas_src>
import jax
import jax.numpy as jnp
from jax.experimental import pallas as pl
from jax.experimental.pallas import tpu as pltpu


def _round_up(x, m):
    return ((x + m - 1) // m) * m


def _fc_pred_kernel(hg_ref, w1_ref, b1_ref, w2_ref, b2_ref, out_ref):
    # hg_ref : [TB, D_in] (f32 or bf16)   w1_ref : [D_in, H] (same dtype)
    # b1_ref : [1, H] f32                 w2_ref : [1, H] f32 (lane-major row)
    # b2_ref : [1]    f32 (SMEM scalar)   out_ref: [TB, 1] f32
    h = jnp.dot(hg_ref[...], w1_ref[...], preferred_element_type=jnp.float32)
    h = jnp.maximum(h + b1_ref[...], 0.0)                         # [TB, H] f32 (VPU)
    # Second linear (H -> 1): broadcast multiply (VPU) + lane reduce (XLU),
    # instead of an underfilled N=1 MXU matmul; keepdims keeps the result
    # sublane-major so the [TB, 1] store needs no relayout.
    y = jnp.sum(h * w2_ref[...], axis=-1, keepdims=True) + b2_ref[0]
    out_ref[...] = y.astype(out_ref.dtype)


def dagnn_fc_pred(hg, w1, b1, w2, b2, *, block_rows=None):
    """DAGNN.fc_pred head: ReLU(hg @ w1 + b1) @ w2 + b2 -> [B, 1] float32.

    hg: [B, D_in] (float32 or bfloat16 -- consumed as-is, never re-cast or
    padded on the host), w1: [D_in, H], b1: [H]-like, w2: [H, 1]-like,
    b2: scalar-like.  Numerics follow hg's dtype (bf16 ingress only if the
    backbone already emits bf16); accumulation is always f32.
    """
    B, d_in = hg.shape
    H = w1.shape[1]

    w1_in = w1.astype(hg.dtype)                       # tiny; ingress dtype follows hg
    b1_row = jnp.asarray(b1, jnp.float32).reshape(1, H)
    w2_row = jnp.asarray(w2, jnp.float32).reshape(1, H)   # layer-2 weight, lane-major
    b2_s = jnp.asarray(b2, jnp.float32).reshape(1)

    if block_rows is None:
        if B >= 512:
            # Big tiles amortize per-step overhead; keep >=2 blocks so v7x's
            # two TensorCores both get work; cap keeps double-buffered f32
            # tiles (~5 MiB each at 2048x602) well inside scoped VMEM on all
            # generations (limit set explicitly below).
            block_rows = min(2048, _round_up(pl.cdiv(B, 2), 128))
        else:
            # Tiny batches: single block; call is launch-overhead dominated
            # anyway (fusing into the backbone call would be the real win).
            block_rows = B
    tb = _round_up(max(block_rows, 8), 8)
    num_blocks = pl.cdiv(B, tb)

    cost = pl.CostEstimate(
        flops=2 * B * d_in * H + 4 * B * H,
        transcendentals=0,
        bytes_accessed=(
            hg.size * hg.dtype.itemsize
            + w1_in.size * w1_in.dtype.itemsize
            + (b1_row.size + w2_row.size + b2_s.size + B) * 4
        ),
    )

    return pl.pallas_call(
        _fc_pred_kernel,
        out_shape=jax.ShapeDtypeStruct((B, 1), jnp.float32),
        grid=(num_blocks,),
        in_specs=[
            pl.BlockSpec((tb, d_in), lambda i: (i, 0)),          # hg tiles (pipelined)
            pl.BlockSpec((d_in, H), lambda i: (0, 0)),           # w1 (VMEM-resident)
            pl.BlockSpec((1, H), lambda i: (0, 0)),              # b1 (resident)
            pl.BlockSpec((1, H), lambda i: (0, 0)),              # w2 row (resident)
            pl.BlockSpec(memory_space=pltpu.MemorySpace.SMEM),   # b2 scalar
        ],
        out_specs=pl.BlockSpec((tb, 1), lambda i: (i, 0)),
        compiler_params=pltpu.CompilerParams(
            dimension_semantics=("parallel",),
            vmem_limit_bytes=32 * 1024 * 1024,
        ),
        cost_estimate=cost,
    )(hg, w1_in, b1_row, w2_row, b2_s)


if __name__ == "__main__":
    # Module defaults: hs=301, num_layers=2, pred_hid_channels=64.
    hs, num_layers, pred_hid = 301, 2, 64
    d_in = hs * num_layers  # 602

    key = jax.random.PRNGKey(0)
    k_hg, k_w1, k_b1, k_w2, k_b2, k_hg2, k_hg3 = jax.random.split(key, 7)

    def linear_init(kw, kb, fan_in, fan_out):
        # Matches nn.Linear default init scale; stored as [in, out] so the
        # kernel computes x @ W + b directly.
        bound = 1.0 / (fan_in ** 0.5)
        w = jax.random.uniform(kw, (fan_in, fan_out), jnp.float32, -bound, bound)
        b = jax.random.uniform(kb, (fan_out,), jnp.float32, -bound, bound)
        return w, b

    w1, b1 = linear_init(k_w1, k_b1, d_in, pred_hid)
    w2, b2 = linear_init(k_w2, k_b2, pred_hid, 1)   # w2: [H, 1], b2: [1]

    def ref_head(hg_in):
        # Pure-JAX reference in the same ingress dtype as hg_in (f32 accumulate).
        h = jnp.maximum(
            jnp.dot(hg_in, w1.astype(hg_in.dtype),
                    preferred_element_type=jnp.float32) + b1[None, :], 0.0)
        return (h @ w2 + b2).astype(jnp.float32)

    # 1) Small batch, f32 path (tight exactness check).
    hg = jax.random.normal(k_hg, (4, d_in), dtype=jnp.float32)
    out = jax.block_until_ready(dagnn_fc_pred(hg, w1, b1, w2, b2))
    assert out.shape == (4, 1)
    assert jnp.allclose(out, ref_head(hg), atol=1e-4, rtol=1e-4)

    # 2) bf16-ingress path: backbone emits bf16 hg; kernel consumes it as-is
    #    (no wrapper-side cast / extra HBM pass).  Checked vs bf16-ingress ref.
    hg_bf16 = hg.astype(jnp.bfloat16)
    out_bf = jax.block_until_ready(dagnn_fc_pred(hg_bf16, w1, b1, w2, b2))
    assert jnp.allclose(out_bf, ref_head(hg_bf16), atol=2e-3, rtol=2e-3)

    # 3) Multi-block grid with a ragged last block (no host-side pad; the
    #    masked tail writes never leave VMEM wrong data in out[:B]).
    hg2 = jax.random.normal(k_hg2, (300, d_in), dtype=jnp.float32)
    out2 = jax.block_until_ready(
        dagnn_fc_pred(hg2, w1, b1, w2, b2, block_rows=128))
    assert out2.shape == (300, 1)
    assert jnp.allclose(out2, ref_head(hg2), atol=1e-4, rtol=1e-4)

    # 4) Default tile selection path (B >= 512 -> two blocks, ragged tail).
    hg3 = jax.random.normal(k_hg3, (700, d_in), dtype=jnp.float32)
    out3 = jax.block_until_ready(dagnn_fc_pred(hg3, w1, b1, w2, b2))
    assert out3.shape == (700, 1)
    assert jnp.allclose(out3, ref_head(hg3), atol=1e-4, rtol=1e-4)

    print("KERNEL_OK")
</pallas_src>

<mosaic_0001>
module attributes {stable_mosaic.version = 11 : i64} {
  func.func @_fc_pred_kernel(%arg0: i32, %arg1: memref<8x602xf32, #tpu.memory_space<vmem>>, %arg2: memref<602x64xf32, #tpu.memory_space<vmem>>, %arg3: memref<1x64xf32, #tpu.memory_space<vmem>>, %arg4: memref<1x64xf32, #tpu.memory_space<vmem>>, %arg5: memref<1xf32, #tpu.memory_space<smem>>, %arg6: memref<8x1xf32, #tpu.memory_space<vmem>>) attributes {dimension_semantics = [#tpu.dimension_semantics<parallel>], iteration_bounds = array<i64: 1>, scalar_prefetch = 0 : i64, scratch_operands = 0 : i64, tpu.core_type = #tpu.core_type<tc>, window_params = [{transform_indices = @transform_0, window_bounds = array<i64: 8, 602>}, {pipeline_mode = #tpu.pipeline_mode<synchronous>, transform_indices = @transform_1, window_bounds = array<i64: 602, 64>}, {pipeline_mode = #tpu.pipeline_mode<synchronous>, transform_indices = @transform_2, window_bounds = array<i64: 1, 64>}, {pipeline_mode = #tpu.pipeline_mode<synchronous>, transform_indices = @transform_3, window_bounds = array<i64: 1, 64>}, {transform_indices = @transform_4, window_bounds = array<i64: 1>}, {transform_indices = @transform_5, window_bounds = array<i64: 8, 1>}]} {
    %c0 = arith.constant 0 : index
    %c0_0 = arith.constant 0 : index
    %0 = vector.load %arg1[%c0, %c0_0] : memref<8x602xf32, #tpu.memory_space<vmem>>, vector<8x602xf32>
    %c0_1 = arith.constant 0 : index
    %c0_2 = arith.constant 0 : index
    %1 = vector.load %arg2[%c0_1, %c0_2] : memref<602x64xf32, #tpu.memory_space<vmem>>, vector<602x64xf32>
    %cst = arith.constant dense<0.000000e+00> : vector<8x64xf32>
    %2 = tpu.matmul %0, %1, %cst {dimension_numbers = #tpu.dot_dimension_numbers<[1], [0], [0], [1], [0, 0, 1, 1], [], []>} : vector<8x602xf32>, vector<602x64xf32>, vector<8x64xf32> -> vector<8x64xf32>
    %c0_3 = arith.constant 0 : index
    %c0_4 = arith.constant 0 : index
    %3 = vector.load %arg3[%c0_3, %c0_4] : memref<1x64xf32, #tpu.memory_space<vmem>>, vector<1x64xf32>
    %4 = vector.broadcast %3 : vector<1x64xf32> to vector<8x64xf32>
    %5 = arith.addf %2, %4 : vector<8x64xf32>
    %cst_5 = arith.constant 0.000000e+00 : f32
    %6 = vector.broadcast %cst_5 : f32 to vector<8x64xf32>
    %7 = arith.maximumf %5, %6 : vector<8x64xf32>
    %c0_6 = arith.constant 0 : index
    %c0_7 = arith.constant 0 : index
    %8 = vector.load %arg4[%c0_6, %c0_7] : memref<1x64xf32, #tpu.memory_space<vmem>>, vector<1x64xf32>
    %9 = vector.broadcast %8 : vector<1x64xf32> to vector<8x64xf32>
    %10 = arith.mulf %7, %9 : vector<8x64xf32>
    %cst_8 = arith.constant dense<0.000000e+00> : vector<8xf32>
    %11 = vector.multi_reduction <add>, %10, %cst_8 [1] : vector<8x64xf32> to vector<8xf32>
    %12 = vector.shape_cast %11 : vector<8xf32> to vector<8x1xf32>
    %c0_9 = arith.constant 0 : index
    %13 = memref.load %arg5[%c0_9] : memref<1xf32, #tpu.memory_space<smem>>
    %14 = vector.broadcast %13 : f32 to vector<8x1xf32>
    %15 = arith.addf %12, %14 : vector<8x1xf32>
    %c0_10 = arith.constant 0 : index
    %c0_11 = arith.constant 0 : index
    %16 = vector.load %arg6[%c0_10, %c0_11] : memref<8x1xf32, #tpu.memory_space<vmem>>, vector<8x1xf32>
    tpu.vector_store %arg6[%c0_10, %c0_11], %15 {strides = array<i32>} : memref<8x1xf32, #tpu.memory_space<vmem>>, vector<8x1xf32>,
    return
  }
  func.func @transform_0(%arg0: i32) -> (i32, i32) {
    %c0_i32 = arith.constant 0 : i32
    %c0_i32_0 = arith.constant 0 : i32
    return %arg0, %c0_i32 : i32, i32
  }
  func.func @transform_1(%arg0: i32) -> (i32, i32) {
    %c0_i32 = arith.constant 0 : i32
    %c0_i32_0 = arith.constant 0 : i32
    %c0_i32_1 = arith.constant 0 : i32
    return %c0_i32, %c0_i32_0 : i32, i32
  }
  func.func @transform_2(%arg0: i32) -> (i32, i32) {
    %c0_i32 = arith.constant 0 : i32
    %c0_i32_0 = arith.constant 0 : i32
    %c0_i32_1 = arith.constant 0 : i32
    return %c0_i32, %c0_i32_0 : i32, i32
  }
  func.func @transform_3(%arg0: i32) -> (i32, i32) {
    %c0_i32 = arith.constant 0 : i32
    %c0_i32_0 = arith.constant 0 : i32
    %c0_i32_1 = arith.constant 0 : i32
    return %c0_i32, %c0_i32_0 : i32, i32
  }
  func.func @transform_4(%arg0: i32) -> i32 {
    %c0_i32 = arith.constant 0 : i32
    %c0_i32_0 = arith.constant 0 : i32
    return %c0_i32 : i32
  }
  func.func @transform_5(%arg0: i32) -> (i32, i32) {
    %c0_i32 = arith.constant 0 : i32
    %c0_i32_0 = arith.constant 0 : i32
    return %arg0, %c0_i32 : i32, i32
  }
}

</mosaic_0001>

<llo_original>
// kernel: tpu_custom_call.1
$region0: #{tpu_custom_call.1}
  #allocation0 [shape = 'u32[]', space=smem, size = 0x4, offset = 0x4, fixed_abs, tag = 'smem constant byte address 0x4 - core index']
  #allocation1 [shape = 'u32[144,128]{1,0:T(1,128)}', space=vmem, size = 0x12000, scoped, tag = 'internal scratch']
  #allocation2 [shape = 'f32[1]{0:T(128)S(6)}', space=smem, size = 0x200, scoped, tag = 'scoped memory for tpu_custom_call.1']
  %s0 = inlined_call_operand.vmem [shape: f32[4,602], index: 0, kind: input, shape index: {}]
  %s1 = inlined_call_operand.vmem [shape: f32[602,64], index: 1, kind: input, shape index: {}]
  %s2 = inlined_call_operand.vmem [shape: f32[1,64], index: 2, kind: input, shape index: {}]
  %s3 = inlined_call_operand.vmem [shape: f32[1,64], index: 3, kind: input, shape index: {}]
  %s4 = inlined_call_operand.<no memory space> [shape: f32[1], index: 4, kind: input, shape index: {}]
  %s5 = inlined_call_operand.vmem [shape: f32[4,1], index: 5, kind: output, shape index: {}]
  %s6 = sld [smem:[#allocation0]]
  $region60: #{tpu_custom_call.1} parent=0
    _
  %s8 = ssub.s32 1, %s6
  %s9 = scalar_select 0, %s8, %s6
  %10 = sst [smem:[#allocation2]] %s4
  $region1: #{tpu_custom_call.1} parent=0
    #allocation3 [shape = 'u8[4096]{0}', space=vmem, size = 0x1000, scoped, tag = 'output window, operand 0, single buffered']
    // Predicated region
    $region2: #{tpu_custom_call.1} parent=1 // pred_check
      _
    $region3: #{tpu_custom_call.1} parent=1 // pred_check_branch
      %12 = sbr.rel (0) target = $region5
    $region4: #{tpu_custom_call.1} parent=1 // pred_region
      _
    $region5: #{tpu_custom_call.1} parent=1 // pred_fallthru
      _
    // Predicated region
    $region6: #{tpu_custom_call.1} parent=1 // pred_check
      _
    $region7: #{tpu_custom_call.1} parent=1 // pred_check_branch
      %14 = sbr.rel (0) target = $region9
    $region8: #{tpu_custom_call.1} parent=1 // pred_region
      _
    $region9: #{tpu_custom_call.1} parent=1 // pred_fallthru
      _
    // Predicated region
    $region10: #{tpu_custom_call.1} parent=1 // pred_check
      _
    $region11: #{tpu_custom_call.1} parent=1 // pred_check_branch
      %16 = sbr.rel (0) target = $region13
    $region12: #{tpu_custom_call.1} parent=1 // pred_region
      _
    $region13: #{tpu_custom_call.1} parent=1 // pred_fallthru
      _
    // Predicated region
    $region14: #{tpu_custom_call.1} parent=1 // pred_check
      _
    $region15: #{tpu_custom_call.1} parent=1 // pred_check_branch
      %18 = sbr.rel (0) target = $region17
    $region16: #{tpu_custom_call.1} parent=1 // pred_region
      _
    $region17: #{tpu_custom_call.1} parent=1 // pred_fallthru
      _
    // Predicated region
    $region18: #{tpu_custom_call.1} parent=1 // pred_check
      _
    $region19: #{tpu_custom_call.1} parent=1 // pred_check_branch
      %20 = sbr.rel (0) target = $region21
    $region20: #{tpu_custom_call.1} parent=1 // pred_region
      _
    $region21: #{tpu_custom_call.1} parent=1 // pred_fallthru
      _
    %v21 = vld [vmem:[%s0] sm:$0xff]
    %v22 = vld [vmem:[%s0 + $0x8] sm:$0xff]
    %v23 = vld [vmem:[%s0 + $0x10] sm:$0xf]
    %v24 = vld [vmem:[%s0 + $0x14] sm:$0xff]
    %v25 = vld [vmem:[%s0 + $0x1c] sm:$0xff]
    %v26 = vld [vmem:[%s0 + $0x24] sm:$0xf]
    %v27 = vld [vmem:[%s1] sm:$0xff]
    %v28 = vld [vmem:[%s1 + $0x8] sm:$0xff]
    %v29 = vld [vmem:[%s1 + $0x10] sm:$0xff]
    %v30 = vld [vmem:[%s1 + $0x18] sm:$0xff]
    %v31 = vld [vmem:[%s1 + $0x20] sm:$0xff]
    %v32 = vld [vmem:[%s1 + $0x28] sm:$0xff]
    %v33 = vld [vmem:[%s1 + $0x30] sm:$0xff]
    %v34 = vld [vmem:[%s1 + $0x38] sm:$0xff]
    %v35 = vld [vmem:[%s1 + $0x40] sm:$0xff]
    %v36 = vld [vmem:[%s1 + $0x48] sm:$0xff]
    %v37 = vld [vmem:[%s1 + $0x50] sm:$0xff]
    %v38 = vld [vmem:[%s1 + $0x58] sm:$0xff]
    %v39 = vld [vmem:[%s1 + $0x60] sm:$0xff]
    %v40 = vld [vmem:[%s1 + $0x68] sm:$0xff]
    %v41 = vld [vmem:[%s1 + $0x70] sm:$0xff]
    %v42 = vld [vmem:[%s1 + $0x78] sm:$0xff]
    %v43 = vld [vmem:[%s1 + $0x80] sm:$0xff]
    %v44 = vld [vmem:[%s1 + $0x88] sm:$0xff]
    %v45 = vld [vmem:[%s1 + $0x90] sm:$0xff]
    %v46 = vld [vmem:[%s1 + $0x98] sm:$0xff]
    %v47 = vld [vmem:[%s1 + $0xa0] sm:$0xff]
    %v48 = vld [vmem:[%s1 + $0xa8] sm:$0xff]
    %v49 = vld [vmem:[%s1 + $0xb0] sm:$0xff]
    %v50 = vld [vmem:[%s1 + $0xb8] sm:$0xff]
    %v51 = vld [vmem:[%s1 + $0xc0] sm:$0xff]
    %v52 = vld [vmem:[%s1 + $0xc8] sm:$0xff]
    %v53 = vld [vmem:[%s1 + $0xd0] sm:$0xff]
    %v54 = vld [vmem:[%s1 + $0xd8] sm:$0xff]
    %v55 = vld [vmem:[%s1 + $0xe0] sm:$0xff]
    %v56 = vld [vmem:[%s1 + $0xe8] sm:$0xff]
    %v57 = vld [vmem:[%s1 + $0xf0] sm:$0xff]
    %v58 = vld [vmem:[%s1 + $0xf8] sm:$0xff]
    %v59 = vld [vmem:[%s1 + $0x100] sm:$0xff]
    %v60 = vld [vmem:[%s1 + $0x108] sm:$0xff]
    %v61 = vld [vmem:[%s1 + $0x110] sm:$0xff]
    %v62 = vld [vmem:[%s1 + $0x118] sm:$0xff]
    %v63 = vld [vmem:[%s1 + $0x120] sm:$0xff]
    %v64 = vld [vmem:[%s1 + $0x128] sm:$0xff]
    %v65 = vld [vmem:[%s1 + $0x130] sm:$0xff]
    %v66 = vld [vmem:[%s1 + $0x138] sm:$0xff]
    %v67 = vld [vmem:[%s1 + $0x140] sm:$0xff]
    %v68 = vld [vmem:[%s1 + $0x148] sm:$0xff]
    %v69 = vld [vmem:[%s1 + $0x150] sm:$0xff]
    %v70 = vld [vmem:[%s1 + $0x158] sm:$0xff]
    %v71 = vld [vmem:[%s1 + $0x160] sm:$0xff]
    %v72 = vld [vmem:[%s1 + $0x168] sm:$0xff]
    %v73 = vld [vmem:[%s1 + $0x170] sm:$0xff]
    %v74 = vld [vmem:[%s1 + $0x178] sm:$0xff]
    %v75 = vld [vmem:[%s1 + $0x180] sm:$0xff]
    %v76 = vld [vmem:[%s1 + $0x188] sm:$0xff]
    %v77 = vld [vmem:[%s1 + $0x190] sm:$0xff]
    %v78 = vld [vmem:[%s1 + $0x198] sm:$0xff]
    %v79 = vld [vmem:[%s1 + $0x1a0] sm:$0xff]
    %v80 = vld [vmem:[%s1 + $0x1a8] sm:$0xff]
    %v81 = vld [vmem:[%s1 + $0x1b0] sm:$0xff]
    %v82 = vld [vmem:[%s1 + $0x1b8] sm:$0xff]
    %v83 = vld [vmem:[%s1 + $0x1c0] sm:$0xff]
    %v84 = vld [vmem:[%s1 + $0x1c8] sm:$0xff]
    %v85 = vld [vmem:[%s1 + $0x1d0] sm:$0xff]
    %v86 = vld [vmem:[%s1 + $0x1d8] sm:$0xff]
    %v87 = vld [vmem:[%s1 + $0x1e0] sm:$0xff]
    %v88 = vld [vmem:[%s1 + $0x1e8] sm:$0xff]
    %v89 = vld [vmem:[%s1 + $0x1f0] sm:$0xff]
    %v90 = vld [vmem:[%s1 + $0x1f8] sm:$0xff]
    %v91 = vld [vmem:[%s1 + $0x200] sm:$0xff]
    %v92 = vld [vmem:[%s1 + $0x208] sm:$0xff]
    %v93 = vld [vmem:[%s1 + $0x210] sm:$0xff]
    %v94 = vld [vmem:[%s1 + $0x218] sm:$0xff]
    %v95 = vld [vmem:[%s1 + $0x220] sm:$0xff]
    %v96 = vld [vmem:[%s1 + $0x228] sm:$0xff]
    %v97 = vld [vmem:[%s1 + $0x230] sm:$0xff]
    %v98 = vld [vmem:[%s1 + $0x238] sm:$0xff]
    %v99 = vld [vmem:[%s1 + $0x240] sm:$0xff]
    %v100 = vld [vmem:[%s1 + $0x248] sm:$0xff]
    %v101 = vld [vmem:[%s1 + $0x250] sm:$0xff]
    %v102 = vld [vmem:[%s1 + $0x258] sm:$0x3]
    %v103 = vld [vmem:[%s2] sm:$0x1]
    %v105 = vlaneseq
    %v106 = vshrl.u32 %v105, 7
    %v107 = vsub.s32 0, %v106
    %v108 = vrot.slane %v103, %v107
    %v116 = vcombine.low %v21, %v24
    %v117 = vcombine.high %v21, %v24
    %v118 = vcombine.low %v22, %v25
    %v119 = vcombine.high %v22, %v25
    %v120 = vcombine.low %v23, %v26
    %vm125 = vcmask 736256
    %v126 = vsel %vm125, %v120, 0
    %vm128 = vcmask 1041408
    %v130 = vsel %vm128, %v102, 0
    %132 = vmatprep.subr.mxu0 0.0
    %133 = vmatpush1.msra.mxu0 %v27
    %134 = vmatprep.subr.mxu0 0.0
    %135 = vmatpush1.msra.mxu0 %v28
    %136 = vmatprep.subr.mxu0 0.0
    %137 = vmatpush1.msra.mxu0 %v29
    %138 = vmatprep.subr.mxu0 0.0
    %139 = vmatpush1.msra.mxu0 %v30
    %140 = vmatprep.subr.mxu0 0.0
    %141 = vmatpush1.msra.mxu0 %v31
    %142 = vmatprep.subr.mxu0 0.0
    %143 = vmatpush1.msra.mxu0 %v32
    %144 = vmatprep.subr.mxu0 0.0
    %145 = vmatpush1.msra.mxu0 %v33
    %146 = vmatprep.subr.mxu0 0.0
    %147 = vmatpush1.msra.mxu0 %v34
    %148 = vmatprep.subr.mxu0 0.0
    %149 = vmatpush1.msra.mxu0 %v35
    %150 = vmatprep.subr.mxu0 0.0
    %151 = vmatpush1.msra.mxu0 %v36
    %152 = vmatprep.subr.mxu0 0.0
    %153 = vmatpush1.msra.mxu0 %v37
    %154 = vmatprep.subr.mxu0 0.0
    %155 = vmatpush1.msra.mxu0 %v38
    %156 = vmatprep.subr.mxu0 0.0
    %157 = vmatpush1.msra.mxu0 %v39
    %158 = vmatprep.subr.mxu0 0.0
    %159 = vmatpush1.msra.mxu0 %v40
    %160 = vmatprep.subr.mxu0 0.0
    %161 = vmatpush1.msra.mxu0 %v41
    %162 = vmatprep.subr.mxu0 0.0
    %163 = vmatpush1.msra.mxu0 %v42
    %164 = vmatprep.subr.mxu0 0.0
    %165 = vmatpush1.msra.mxu0 %v43
    %166 = vmatprep.subr.mxu0 0.0
    %167 = vmatpush1.msra.mxu0 %v44
    %168 = vmatprep.subr.mxu0 0.0
    %169 = vmatpush1.msra.mxu0 %v45
    %170 = vmatprep.subr.mxu0 0.0
    %171 = vmatpush1.msra.mxu0 %v46
    %172 = vmatprep.subr.mxu0 0.0
    %173 = vmatpush1.msra.mxu0 %v47
    %174 = vmatprep.subr.mxu0 0.0
    %175 = vmatpush1.msra.mxu0 %v48
    %176 = vmatprep.subr.mxu0 0.0
    %177 = vmatpush1.msra.mxu0 %v49
    %178 = vmatprep.subr.mxu0 0.0
    %179 = vmatpush1.msra.mxu0 %v50
    %180 = vmatprep.subr.mxu0 0.0
    %181 = vmatpush1.msra.mxu0 %v51
    %182 = vmatprep.subr.mxu0 0.0
    %183 = vmatpush1.msra.mxu0 %v52
    %184 = vmatprep.subr.mxu0 0.0
    %185 = vmatpush1.msra.mxu0 %v53
    %186 = vmatprep.subr.mxu0 0.0
    %187 = vmatpush1.msra.mxu0 %v54
    %188 = vmatprep.subr.mxu0 0.0
    %189 = vmatpush1.msra.mxu0 %v55
    %190 = vmatprep.subr.mxu0 0.0
    %191 = vmatpush1.msra.mxu0 %v56
    %192 = vmatprep.subr.mxu0 0.0
    %193 = vmatpush1.msra.mxu0 %v57
    %194 = vmatprep.subr.mxu0 0.0
    %195 = vmatpush1.msra.mxu0 %v58
    %196 = vmatprep.mubr.f32.mxu0 %v117
    %197 = vmatmul.mubr.f32.gmra.mrb[0].mxu0 %v116
    %v198 = vpop.f32.mrb[0].mxu0
    %v199 = vadd.f32 %v108, %v198
    %v200 = vpop.f32.mrb[0].mxu0
    %201 = vdwg.mxu0
    %202 = vmatprep.subr.mxu0 0.0
    %203 = vmatpush1.msra.mxu0 %v59
    %204 = vmatprep.subr.mxu0 0.0
    %205 = vmatpush1.msra.mxu0 %v60
    %206 = vmatprep.subr.mxu0 0.0
    %207 = vmatpush1.msra.mxu0 %v61
    %208 = vmatprep.subr.mxu0 0.0
    %209 = vmatpush1.msra.mxu0 %v62
    %210 = vmatprep.subr.mxu0 0.0
    %211 = vmatpush1.msra.mxu0 %v63
    %212 = vmatprep.subr.mxu0 0.0
    %213 = vmatpush1.msra.mxu0 %v64
    %214 = vmatprep.subr.mxu0 0.0
    %215 = vmatpush1.msra.mxu0 %v65
    %216 = vmatprep.subr.mxu0 0.0
    %217 = vmatpush1.msra.mxu0 %v66
    %218 = vmatprep.subr.mxu0 0.0
    %219 = vmatpush1.msra.mxu0 %v67
    %220 = vmatprep.subr.mxu0 0.0
    %221 = vmatpush1.msra.mxu0 %v68
    %222 = vmatprep.subr.mxu0 0.0
    %223 = vmatpush1.msra.mxu0 %v69
    %224 = vmatprep.subr.mxu0 0.0
    %225 = vmatpush1.msra.mxu0 %v70
    %226 = vmatprep.subr.mxu0 0.0
    %227 = vmatpush1.msra.mxu0 %v71
    %228 = vmatprep.subr.mxu0 0.0
    %229 = vmatpush1.msra.mxu0 %v72
    %230 = vmatprep.subr.mxu0 0.0
    %231 = vmatpush1.msra.mxu0 %v73
    %232 = vmatprep.subr.mxu0 0.0
    %233 = vmatpush1.msra.mxu0 %v74
    %234 = vmatprep.subr.mxu0 0.0
    %235 = vmatpush1.msra.mxu0 %v75
    %236 = vmatprep.subr.mxu0 0.0
    %237 = vmatpush1.msra.mxu0 %v76
    %238 = vmatprep.subr.mxu0 0.0
    %239 = vmatpush1.msra.mxu0 %v77
    %240 = vmatprep.subr.mxu0 0.0
    %241 = vmatpush1.msra.mxu0 %v78
    %242 = vmatprep.subr.mxu0 0.0
    %243 = vmatpush1.msra.mxu0 %v79
    %244 = vmatprep.subr.mxu0 0.0
    %245 = vmatpush1.msra.mxu0 %v80
    %246 = vmatprep.subr.mxu0 0.0
    %247 = vmatpush1.msra.mxu0 %v81
    %248 = vmatprep.subr.mxu0 0.0
    %249 = vmatpush1.msra.mxu0 %v82
    %250 = vmatprep.subr.mxu0 0.0
    %251 = vmatpush1.msra.mxu0 %v83
    %252 = vmatprep.subr.mxu0 0.0
    %253 = vmatpush1.msra.mxu0 %v84
    %254 = vmatprep.subr.mxu0 0.0
    %255 = vmatpush1.msra.mxu0 %v85
    %256 = vmatprep.subr.mxu0 0.0
    %257 = vmatpush1.msra.mxu0 %v86
    %258 = vmatprep.subr.mxu0 0.0
    %259 = vmatpush1.msra.mxu0 %v87
    %260 = vmatprep.subr.mxu0 0.0
    %261 = vmatpush1.msra.mxu0 %v88
    %262 = vmatprep.subr.mxu0 0.0
    %263 = vmatpush1.msra.mxu0 %v89
    %264 = vmatprep.subr.mxu0 0.0
    %265 = vmatpush1.msra.mxu0 %v90
    %266 = vmatprep.mubr.f32.mxu0 %v119
    %267 = vmatmul.mubr.f32.gmra.mrb[0].mxu0 %v118
    %v268 = vpop.f32.mrb[0].mxu0
    %v269 = vadd.f32 %v199, %v268
    %v270 = vpop.f32.mrb[0].mxu0
    %271 = vdwg.mxu0
    %272 = vmatprep.subr.mxu0 0.0
    %273 = vmatpush1.msra.mxu0 %v91
    %274 = vmatprep.subr.mxu0 0.0
    %275 = vmatpush1.msra.mxu0 %v92
    %276 = vmatprep.subr.mxu0 0.0
    %277 = vmatpush1.msra.mxu0 %v93
    %278 = vmatprep.subr.mxu0 0.0
    %279 = vmatpush1.msra.mxu0 %v94
    %280 = vmatprep.subr.mxu0 0.0
    %281 = vmatpush1.msra.mxu0 %v95
    %282 = vmatprep.subr.mxu0 0.0
    %283 = vmatpush1.msra.mxu0 %v96
    %284 = vmatprep.subr.mxu0 0.0
    %285 = vmatpush1.msra.mxu0 %v97
    %286 = vmatprep.subr.mxu0 0.0
    %287 = vmatpush1.msra.mxu0 %v98
    %288 = vmatprep.subr.mxu0 0.0
    %289 = vmatpush1.msra.mxu0 %v99
    %290 = vmatprep.subr.mxu0 0.0
    %291 = vmatpush1.msra.mxu0 %v100
    %292 = vmatprep.subr.mxu0 0.0
    %293 = vmatpush1.msra.mxu0 %v101
    %294 = vmatprep.subr.mxu0 0.0
    %295 = vmatpush1.msra.mxu0 %v130
    %296 = vmatprep.subr.mxu0 0.0
    %297 = vmatpush1.msra.mxu0 0.0
    %298 = vmatprep.subr.mxu0 0.0
    %299 = vmatpush1.msra.mxu0 0.0
    %300 = vmatprep.subr.mxu0 0.0
    %301 = vmatpush1.msra.mxu0 0.0
    %302 = vmatprep.subr.mxu0 0.0
    %303 = vmatpush1.msra.mxu0 0.0
    %304 = vmatprep.subr.mxu0 0.0
    %305 = vmatpush1.msra.mxu0 0.0
    %306 = vmatprep.subr.mxu0 0.0
    %307 = vmatpush1.msra.mxu0 0.0
    %308 = vmatprep.subr.mxu0 0.0
    %309 = vmatpush1.msra.mxu0 0.0
    %310 = vmatprep.subr.mxu0 0.0
    %311 = vmatpush1.msra.mxu0 0.0
    %312 = vmatprep.subr.mxu0 0.0
    %313 = vmatpush1.msra.mxu0 0.0
    %314 = vmatprep.subr.mxu0 0.0
    %315 = vmatpush1.msra.mxu0 0.0
    %316 = vmatprep.subr.mxu0 0.0
    %317 = vmatpush1.msra.mxu0 0.0
    %318 = vmatprep.subr.mxu0 0.0
    %319 = vmatpush1.msra.mxu0 0.0
    %320 = vmatprep.subr.mxu0 0.0
    %321 = vmatpush1.msra.mxu0 0.0
    %322 = vmatprep.subr.mxu0 0.0
    %323 = vmatpush1.msra.mxu0 0.0
    %324 = vmatprep.subr.mxu0 0.0
    %325 = vmatpush1.msra.mxu0 0.0
    %326 = vmatprep.subr.mxu0 0.0
    %327 = vmatpush1.msra.mxu0 0.0
    %328 = vmatprep.subr.mxu0 0.0
    %329 = vmatpush1.msra.mxu0 0.0
    %330 = vmatprep.subr.mxu0 0.0
    %331 = vmatpush1.msra.mxu0 0.0
    %332 = vmatprep.subr.mxu0 0.0
    %333 = vmatpush1.msra.mxu0 0.0
    %334 = vmatprep.subr.mxu0 0.0
    %335 = vmatpush1.msra.mxu0 0.0
    %336 = vmatprep.mubr.f32.mxu0 0.0
    %337 = vmatmul.mubr.f32.gmra.mrb[0].mxu0 %v126
    %v338 = vpop.f32.mrb[0].mxu0
    %v339 = vadd.f32 %v269, %v338
    %v340 = vpop.f32.mrb[0].mxu0
    %341 = vdwg.mxu0
    %v342 = vmax.f32 %v339, 0.0
    %v343 = vld [vmem:[%s3] sm:$0x1]
    %v345 = vlaneseq
    %v346 = vshrl.u32 %v345, 7
    %v347 = vsub.s32 0, %v346
    %v348 = vrot.slane %v343, %v347
    %v350 = vmul.f32 %v342, %v348
    %vm351 = vcmask 523264
    %v352 = vsel %vm351, %v350, 0.0
    %353 = vadd.xlane.f32.xlu0 %v352
    %v354 = vpop.xlane.xlu0 %353
    %s355 = sld [smem:[#allocation2]]
    %v356 = vstv %s355
    %v357 = vadd.f32 %v354, %v356
    %vm358 = vcmask 7168
    %359 = vst.msk [vmem:[#allocation3] sm:$0xff] %vm358, %v357
    // Predicated region
    $region22: #{tpu_custom_call.1} parent=1 // pred_check
      _
    $region23: #{tpu_custom_call.1} parent=1 // pred_check_branch
      %361 = sbr.rel (0) target = $region25
    $region24: #{tpu_custom_call.1} parent=1 // pred_region
      // Predicated region
      $region26: #{tpu_custom_call.1} parent=24 // pred_check
        _
      $region27: #{tpu_custom_call.1} parent=24 // pred_check_branch
        %363 = sbr.rel (0) target = $region29
      $region28: #{tpu_custom_call.1} parent=24 // pred_region
        // Predicated region
        $region30: #{tpu_custom_call.1} parent=28 // pred_check
          _
        $region31: #{tpu_custom_call.1} parent=28 // pred_check_branch
          %365 = sbr.rel target = $region33
        $region32: #{tpu_custom_call.1} parent=28 // pred_region
          // Predicated region
          $region45: #{tpu_custom_call.1} parent=32 // pred_check
            _
          $region46: #{tpu_custom_call.1} parent=32 // pred_check_branch
            %380 = sbr.rel (0) target = $region48
          $region47: #{tpu_custom_call.1} parent=32 // pred_region
            loop: start=0, step=1, limit=1
            $region49: #{tpu_custom_call.1} parent=47 // loop_pre_header
              _
            $region50: #{tpu_custom_call.1} parent=47 // loop_header
              %s383 = sphi 0, %s387
              %p384 = scmp.ge.s32.totalorder %s383, 1
              %s388 = sphi [#allocation3], [#allocation3]
              %s389 = sphi %s5, %s5
            $region51: #{tpu_custom_call.1} parent=47 // loop_header_branch
              %386 = sbr.rel (%p384) target = $region55
            $region52: #{tpu_custom_call.1} parent=47 // loop_body
              %v390 = vld [vmem:[%s388] sm:$0xf]
              %391 = vst [vmem:[%s389] sm:$0xf] %v390
            $region53: #{tpu_custom_call.1} parent=47 // loop_footer
              %s387 = sadd.s32 1, %s383
            $region54: #{tpu_custom_call.1} parent=47 // loop_footer_branch
              %382 = sbr.rel target = $region50
            $region55: #{tpu_custom_call.1} parent=47 // loop_exit
              _
          $region48: #{tpu_custom_call.1} parent=32 // pred_fallthru
            _
        $region33: #{tpu_custom_call.1} parent=28 // pred_fallthru
          _
        // Predicated region
        $region34: #{tpu_custom_call.1} parent=28 // pred_check
          _
        $region35: #{tpu_custom_call.1} parent=28 // pred_check_branch
          %367 = sbr.rel (0) target = $region37
        $region36: #{tpu_custom_call.1} parent=28 // pred_region
          loop: start=0, step=1, limit=1
          $region38: #{tpu_custom_call.1} parent=36 // loop_pre_header
            _
          $region39: #{tpu_custom_call.1} parent=36 // loop_header
            %s370 = sphi 0, %s374
            %p371 = scmp.ge.s32.totalorder %s370, 1
            %s375 = sphi [#allocation3], [#allocation3]
            %s376 = sphi %s5, %s5
          $region40: #{tpu_custom_call.1} parent=36 // loop_header_branch
            %373 = sbr.rel (%p371) target = $region44
          $region41: #{tpu_custom_call.1} parent=36 // loop_body
            %v377 = vld [vmem:[%s375] sm:$0xf]
            %378 = vst [vmem:[%s376] sm:$0xf] %v377
          $region42: #{tpu_custom_call.1} parent=36 // loop_footer
            %s374 = sadd.s32 1, %s370
          $region43: #{tpu_custom_call.1} parent=36 // loop_footer_branch
            %369 = sbr.rel target = $region39
          $region44: #{tpu_custom_call.1} parent=36 // loop_exit
            _
        $region37: #{tpu_custom_call.1} parent=28 // pred_fallthru
          _
      $region29: #{tpu_custom_call.1} parent=24 // pred_fallthru
        _
      %392 = vnop
    $region25: #{tpu_custom_call.1} parent=1 // pred_fallthru
      _
    // Predicated region
    $region56: #{tpu_custom_call.1} parent=1 // pred_check
      _
    $region57: #{tpu_custom_call.1} parent=1 // pred_check_branch
      %394 = sbr.rel (0) target = $region59
    $region58: #{tpu_custom_call.1} parent=1 // pred_region
      _
    $region59: #{tpu_custom_call.1} parent=1 // pred_fallthru
      _

</llo_original>
